<compile_context>
chip_gen: v7x
topology: tpu7x:2x2x1
jax: 0.10.0
libtpu: 0.0.40
codegen_flags: <defaults>
</compile_context>

<pallas_src>
import numpy as np
import jax
import jax.numpy as jnp
from jax.experimental import pallas as pl
from jax.experimental.pallas import tpu as pltpu


_MEAN = np.array([123.675, 116.28, 103.53], dtype=np.float32)
_STD = np.array([58.395, 57.12, 57.375], dtype=np.float32)


def _round_up(x: int, m: int) -> int:
    return ((x + m - 1) // m) * m


# --------------------------------------------------------------------------
# Interpolation matrix exactly reproducing PyTorch F.interpolate(bilinear,
# align_corners=False): src = max(0, (dst + 0.5) * (in/out) - 0.5),
# x0 = floor(src), x1 = min(x0 + 1, in - 1), weights (1 - lam, lam).
# --------------------------------------------------------------------------
def _torch_bilinear_matrix(out_size: int, in_size: int) -> np.ndarray:
    scale = in_size / out_size
    dst = np.arange(out_size, dtype=np.float64)
    src = (dst + 0.5) * scale - 0.5
    src = np.maximum(src, 0.0)
    x0 = np.floor(src).astype(np.int64)
    x0 = np.minimum(x0, in_size - 1)
    x1 = np.minimum(x0 + 1, in_size - 1)
    lam = (src - x0).astype(np.float32)
    W = np.zeros((out_size, in_size), dtype=np.float32)
    W[np.arange(out_size), x0] += (1.0 - lam)
    W[np.arange(out_size), x1] += lam
    return W


def _pick_row_tile(h_out: int) -> int:
    """Output-row tile: one tile when small; else a 128..256 tile (multiple of 8)
    minimizing output padding (prefer the bigger tile on ties for MXU M-dim)."""
    h8 = _round_up(max(h_out, 1), 8)
    if h8 <= 256:
        return h8
    best, best_key = None, None
    for c in range(256, 120, -8):            # 256, 248, ..., 128
        key = (_round_up(h_out, c), -c)
        if best_key is None or key < best_key:
            best, best_key = c, key
    return best


def _pick_k_block(h_in: int, max_k_block: int):
    """Input-row streaming block size.  Prefer a divisor of H_in (multiple of 8) so the
    input never needs a physical pad copy in HBM (that would double HBM traffic)."""
    cap = max(8, min(max_k_block, _round_up(max(h_in, 1), 8)) // 8 * 8)
    for d in range(cap, 7, -8):
        if h_in % d == 0:
            return d, h_in
    return cap, _round_up(h_in, cap)


def _build_row_band(wh_full: np.ndarray, th: int, kblk: int):
    """Split the (H_out_pad, H_in_pad) row-interp matrix into banded per-tile chunks.

    Returns:
      tbl      : int32 (n_tiles * num_k,)  input row-block index per (tile, step)
      wh_tiles : f32   (n_tiles, num_k, th, kblk)  matching weight slices (zeros for pads)
      num_k    : number of banded contraction steps (grid axis extent)
    """
    h_out_pad, _ = wh_full.shape
    n_tiles = h_out_pad // th
    block_lists = []
    for j in range(n_tiles):
        rows = wh_full[j * th:(j + 1) * th]
        nz = np.nonzero(np.any(rows != 0.0, axis=0))[0]
        if nz.size == 0:
            block_lists.append([0])
        else:
            block_lists.append(list(range(int(nz[0]) // kblk, int(nz[-1]) // kblk + 1)))
    num_k = max(len(bl) for bl in block_lists)
    tbl = np.zeros((n_tiles, num_k), dtype=np.int32)
    wh_tiles = np.zeros((n_tiles, num_k, th, kblk), dtype=np.float32)
    for j, blocks in enumerate(block_lists):
        for k in range(num_k):
            if k < len(blocks):
                blk = blocks[k]
                wh_tiles[j, k] = wh_full[j * th:(j + 1) * th, blk * kblk:(blk + 1) * kblk]
            else:
                blk = blocks[-1]   # repeat previous block -> no extra DMA; weights stay zero
            tbl[j, k] = blk
    return tbl.reshape(-1), wh_tiles, num_k


# --------------------------------------------------------------------------
# Kernel.  One grid step = (plane i, output-row tile j, banded contraction step k).
# --------------------------------------------------------------------------
def _make_kernel(order_row_first: bool, compute_dtype):
    def kernel(tbl_ref, scale_ref, bias_ref, wh_ref, wwt_ref, x_ref, o_ref, acc_ref):
        i = pl.program_id(0)        # plane (b * 3 + c)
        k = pl.program_id(2)        # banded contraction step

        @pl.when(k == 0)
        def _init():
            acc_ref[...] = jnp.zeros_like(acc_ref)

        wh = wh_ref[...]                               # (TH, KBLK)
        xb = x_ref[...].astype(compute_dtype)          # (KBLK, W_in)

        if order_row_first:
            # acc(TH, W_in) += Wh_tile @ X_window    (row interpolation, banded K)
            acc_ref[...] += jnp.dot(wh, xb, preferred_element_type=jnp.float32)
        else:
            # acc(TH, W_out_pad) += Wh_tile @ (X_window @ Wwt)
            t = jnp.dot(xb, wwt_ref[...], preferred_element_type=jnp.float32)
            acc_ref[...] += jnp.dot(wh, t.astype(compute_dtype),
                                    preferred_element_type=jnp.float32)

        @pl.when(k == pl.num_programs(2) - 1)
        def _finalize():
            if order_row_first:
                y = jnp.dot(acc_ref[...].astype(compute_dtype), wwt_ref[...],
                            preferred_element_type=jnp.float32)
            else:
                y = acc_ref[...]
            # (255*y - mean[c]) / std[c]  ==  y * scale[c] + bias[c]
            o_ref[...] = (y * scale_ref[i] + bias_ref[i]).astype(o_ref.dtype)

    return kernel


def dino_processor(x: jax.Array, size, *, compute_dtype=jnp.float32,
                   row_tile=None, max_k_block: int = 256) -> jax.Array:
    """JAX/Pallas equivalent of DINO_Processor(size).forward(x).

    x: (B, 3, H, W) float32 in [0, 1] (NCHW).  Returns (B, 3, size[0], size[1]) float32.
    """
    if isinstance(size, int):
        size = (size, size)
    h_out, w_out = int(size[0]), int(size[1])
    bsz, ch, h_in, w_in = x.shape
    assert ch == 3, "DINO_Processor normalizes 3 (RGB) channels"

    # Per-channel affine fold: (255*y - mean)/std == y * (255/std) + (-mean/std).
    scale_c = (255.0 / _STD).astype(np.float32)
    bias_c = (-_MEAN / _STD).astype(np.float32)
    scale = jnp.asarray(np.tile(scale_c, bsz))          # (B*C,)  plane order = b*3 + c
    bias = jnp.asarray(np.tile(bias_c, bsz))            # (B*C,)

    # Tiling parameters.
    th = int(row_tile) if row_tile is not None else _pick_row_tile(h_out)
    assert th % 8 == 0, "row tile must be a multiple of 8 (sublane alignment)"
    h_out_pad = _round_up(h_out, th)
    w_out_pad = _round_up(w_out, 128)                   # lane-dense output stores
    kblk, h_in_pad = _pick_k_block(h_in, int(max_k_block))
    n_tiles = h_out_pad // th
    n_planes = bsz * ch

    # Interpolation matrices (zero-padded to the tiled/aligned shapes).
    wh_full = np.zeros((h_out_pad, h_in_pad), dtype=np.float32)
    wh_full[:h_out, :h_in] = _torch_bilinear_matrix(h_out, h_in)
    wwt_np = np.zeros((w_in, w_out_pad), dtype=np.float32)
    wwt_np[:, :w_out] = _torch_bilinear_matrix(w_out, w_in).T

    tbl_np, wh_tiles_np, num_k = _build_row_band(wh_full, th, kblk)
    k_tot = num_k * kblk

    # Static matmul-order choice (MACs per output-row tile).
    cost_row_first = th * w_in * k_tot + th * w_in * w_out_pad          # (Wh@X) then @Wwt
    cost_col_first = k_tot * w_in * w_out_pad + th * k_tot * w_out_pad  # (X@Wwt) then Wh@
    order_row_first = cost_row_first <= cost_col_first
    acc_n = w_in if order_row_first else w_out_pad

    # Device-side operands.  When computing in bf16, cast X once on the host so the
    # streamed HBM->VMEM traffic for the image halves as well.
    x_dtype = jnp.float32 if compute_dtype == jnp.float32 else compute_dtype
    x_flat = x.reshape(n_planes, h_in, w_in).astype(x_dtype)
    if h_in_pad != h_in:
        # Only when no 8-aligned divisor of H_in exists (extra HBM copy, usually avoided).
        x_flat = jnp.pad(x_flat, ((0, 0), (0, h_in_pad - h_in), (0, 0)))
    tbl = jnp.asarray(tbl_np)                                    # int32 (n_tiles*num_k,)
    wh_tiles = jnp.asarray(wh_tiles_np, dtype=compute_dtype)     # (n_tiles, num_k, th, kblk)
    wwt = jnp.asarray(wwt_np, dtype=compute_dtype)               # (w_in, w_out_pad)

    # Per-step VMEM footprint (double-buffered pipelined blocks + f32 accumulator).
    bpe = jnp.dtype(compute_dtype).itemsize
    bpx = jnp.dtype(x_dtype).itemsize
    est_vmem = (2 * kblk * w_in * bpx          # x window
                + 2 * th * kblk * bpe          # Wh tile
                + 2 * w_in * w_out_pad * bpe   # Wwt (constant index map, still 2 buffers)
                + 2 * th * w_out_pad * 4       # output tile
                + th * acc_n * 4)              # accumulator scratch
    vmem_limit = int(max(32 * 2**20, min(int(est_vmem * 1.4) + (2 << 20), 96 * 2**20)))

    grid_spec = pltpu.PrefetchScalarGridSpec(
        num_scalar_prefetch=3,                  # tbl, scale, bias -> SMEM
        grid=(n_planes, n_tiles, num_k),
        in_specs=[
            # Banded Wh slice for (tile j, step k).
            pl.BlockSpec((None, None, th, kblk),
                         lambda i, j, k, tbl_r, sc_r, bi_r: (j, k, 0, 0)),
            # Column-interp matrix, resident across the grid (constant block index).
            pl.BlockSpec((w_in, w_out_pad),
                         lambda i, j, k, tbl_r, sc_r, bi_r: (0, 0)),
            # Input row window: block index looked up in the prefetched band table.
            pl.BlockSpec((None, kblk, w_in),
                         lambda i, j, k, tbl_r, sc_r, bi_r: (i, tbl_r[j * num_k + k], 0)),
        ],
        out_specs=pl.BlockSpec((None, th, w_out_pad),
                               lambda i, j, k, tbl_r, sc_r, bi_r: (i, j, 0)),
        scratch_shapes=[pltpu.VMEM((th, acc_n), jnp.float32)],
    )

    out_pad = pl.pallas_call(
        _make_kernel(order_row_first, compute_dtype),
        out_shape=jax.ShapeDtypeStruct((n_planes, h_out_pad, w_out_pad), jnp.float32),
        grid_spec=grid_spec,
        compiler_params=pltpu.CompilerParams(
            dimension_semantics=("parallel", "parallel", "arbitrary"),
            vmem_limit_bytes=vmem_limit,
        ),
    )(tbl, scale, bias, wh_tiles, wwt, x_flat)

    return out_pad[:, :h_out, :w_out].reshape(bsz, ch, h_out, w_out)


# --------------------------------------------------------------------------
# Pure-JAX reference (same interpolation matrices) for correctness checks.
# --------------------------------------------------------------------------
def _reference(x, size):
    if isinstance(size, int):
        size = (size, size)
    h_out, w_out = size
    wh = jnp.asarray(_torch_bilinear_matrix(h_out, x.shape[2]))
    ww = jnp.asarray(_torch_bilinear_matrix(w_out, x.shape[3]))
    y = jnp.einsum("oh,bchw->bcow", wh, x)
    y = jnp.einsum("pw,bcow->bcop", ww, y)
    mean = jnp.asarray(_MEAN)
    std = jnp.asarray(_STD)
    return (255.0 * y - mean[None, :, None, None]) / std[None, :, None, None]


if __name__ == "__main__":
    k1, k2, k3 = jax.random.split(jax.random.PRNGKey(0), 3)

    # 1) Basic small downsample: single row tile, single K block (order A).
    x1 = jax.random.uniform(k1, (2, 3, 16, 16), dtype=jnp.float32)
    out = jax.block_until_ready(dino_processor(x1, (8, 8)))
    assert out.shape == (2, 3, 8, 8)
    np.testing.assert_allclose(np.asarray(out), np.asarray(_reference(x1, (8, 8))),
                               rtol=1e-5, atol=1e-4)

    # 2) Force the multi-row-tile + multi-K banded path (ragged bands, padded K slots).
    x2 = jax.random.uniform(k2, (1, 3, 40, 40), dtype=jnp.float32)
    out2 = jax.block_until_ready(dino_processor(x2, (24, 24), row_tile=8, max_k_block=8))
    assert out2.shape == (1, 3, 24, 24)
    np.testing.assert_allclose(np.asarray(out2), np.asarray(_reference(x2, (24, 24))),
                               rtol=1e-5, atol=1e-4)

    # 3) Width-heavy shape so the (X @ Wwt)-first matmul order is selected.
    x3 = jax.random.uniform(k3, (1, 3, 8, 256), dtype=jnp.float32)
    out3 = jax.block_until_ready(dino_processor(x3, (32, 128)))
    assert out3.shape == (1, 3, 32, 128)
    np.testing.assert_allclose(np.asarray(out3), np.asarray(_reference(x3, (32, 128))),
                               rtol=1e-5, atol=1e-4)

    # 4) Optional reduced-precision path: bf16 matmuls + bf16 X streaming, f32 accum.
    out_bf16 = jax.block_until_ready(dino_processor(x1, (8, 8), compute_dtype=jnp.bfloat16))
    np.testing.assert_allclose(np.asarray(out_bf16), np.asarray(_reference(x1, (8, 8))),
                               rtol=5e-2, atol=1e-1)

    print("KERNEL_OK")
</pallas_src>

<mosaic_0001>
module attributes {stable_mosaic.version = 11 : i64} {
  func.func @kernel(%arg0: i32, %arg1: i32, %arg2: i32, %arg3: memref<1xi32, #tpu.memory_space<smem>>, %arg4: memref<6xf32, #tpu.memory_space<smem>>, %arg5: memref<6xf32, #tpu.memory_space<smem>>, %arg6: memref<1x1x8x16xf32, #tpu.memory_space<vmem>>, %arg7: memref<16x128xf32, #tpu.memory_space<vmem>>, %arg8: memref<1x16x16xf32, #tpu.memory_space<vmem>>, %arg9: memref<1x8x128xf32, #tpu.memory_space<vmem>>, %arg10: memref<8x16xf32, #tpu.memory_space<vmem>>) attributes {dimension_semantics = [#tpu.dimension_semantics<parallel>, #tpu.dimension_semantics<parallel>, #tpu.dimension_semantics<arbitrary>], iteration_bounds = array<i64: 6, 1, 1>, scalar_prefetch = 3 : i64, scratch_operands = 1 : i64, tpu.core_type = #tpu.core_type<tc>, window_params = [{transform_indices = @transform_0, window_bounds = array<i64: 1, 1, 8, 16>}, {pipeline_mode = #tpu.pipeline_mode<synchronous>, transform_indices = @transform_1, window_bounds = array<i64: 16, 128>}, {transform_indices = @transform_2, window_bounds = array<i64: 1, 16, 16>}, {transform_indices = @transform_3, window_bounds = array<i64: 1, 8, 128>}]} {
    %c0_i32 = arith.constant 0 : i32
    %0 = arith.cmpi eq, %arg2, %c0_i32 : i32
    %1 = arith.extui %0 : i1 to i32
    %c0_i32_0 = arith.constant 0 : i32
    %2 = arith.cmpi ne, %1, %c0_i32_0 : i32
    scf.if %2 {
      %cst_13 = arith.constant 0.000000e+00 : f32
      %14 = vector.broadcast %cst_13 : f32 to vector<8x16xf32>
      %c0_14 = arith.constant 0 : index
      %c0_15 = arith.constant 0 : index
      %15 = vector.load %arg10[%c0_14, %c0_15] : memref<8x16xf32, #tpu.memory_space<vmem>>, vector<8x16xf32>
      tpu.vector_store %arg10[%c0_14, %c0_15], %14 {strides = array<i32>} : memref<8x16xf32, #tpu.memory_space<vmem>>, vector<8x16xf32>,
    } else {
    }
    %c0 = arith.constant 0 : index
    %c0_1 = arith.constant 0 : index
    %c0_2 = arith.constant 0 : index
    %c0_3 = arith.constant 0 : index
    %3 = vector.load %arg6[%c0, %c0_1, %c0_2, %c0_3] : memref<1x1x8x16xf32, #tpu.memory_space<vmem>>, vector<1x1x8x16xf32>
    %4 = vector.shape_cast %3 : vector<1x1x8x16xf32> to vector<8x16xf32>
    %c0_4 = arith.constant 0 : index
    %c0_5 = arith.constant 0 : index
    %c0_6 = arith.constant 0 : index
    %5 = vector.load %arg8[%c0_4, %c0_5, %c0_6] : memref<1x16x16xf32, #tpu.memory_space<vmem>>, vector<1x16x16xf32>
    %6 = vector.shape_cast %5 : vector<1x16x16xf32> to vector<16x16xf32>
    %c0_7 = arith.constant 0 : index
    %c0_8 = arith.constant 0 : index
    %7 = vector.load %arg10[%c0_7, %c0_8] : memref<8x16xf32, #tpu.memory_space<vmem>>, vector<8x16xf32>
    %cst = arith.constant dense<0.000000e+00> : vector<8x16xf32>
    %8 = tpu.matmul %4, %6, %cst {dimension_numbers = #tpu.dot_dimension_numbers<[1], [0], [0], [1], [0, 0, 1, 1], [], []>} : vector<8x16xf32>, vector<16x16xf32>, vector<8x16xf32> -> vector<8x16xf32>
    %9 = arith.addf %7, %8 : vector<8x16xf32>
    %c0_9 = arith.constant 0 : index
    %c0_10 = arith.constant 0 : index
    %10 = vector.load %arg10[%c0_9, %c0_10] : memref<8x16xf32, #tpu.memory_space<vmem>>, vector<8x16xf32>
    tpu.vector_store %arg10[%c0_9, %c0_10], %9 {strides = array<i32>} : memref<8x16xf32, #tpu.memory_space<vmem>>, vector<8x16xf32>,
    %c0_i32_11 = arith.constant 0 : i32
    %11 = arith.cmpi eq, %arg2, %c0_i32_11 : i32
    %12 = arith.extui %11 : i1 to i32
    %c0_i32_12 = arith.constant 0 : i32
    %13 = arith.cmpi ne, %12, %c0_i32_12 : i32
    scf.if %13 {
      %c0_13 = arith.constant 0 : index
      %c0_14 = arith.constant 0 : index
      %14 = vector.load %arg10[%c0_13, %c0_14] : memref<8x16xf32, #tpu.memory_space<vmem>>, vector<8x16xf32>
      %c0_15 = arith.constant 0 : index
      %c0_16 = arith.constant 0 : index
      %15 = vector.load %arg7[%c0_15, %c0_16] : memref<16x128xf32, #tpu.memory_space<vmem>>, vector<16x128xf32>
      %cst_17 = arith.constant dense<0.000000e+00> : vector<8x128xf32>
      %16 = tpu.matmul %14, %15, %cst_17 {dimension_numbers = #tpu.dot_dimension_numbers<[1], [0], [0], [1], [0, 0, 1, 1], [], []>} : vector<8x16xf32>, vector<16x128xf32>, vector<8x128xf32> -> vector<8x128xf32>
      %17 = arith.index_cast %arg0 : i32 to index
      %18 = memref.load %arg4[%17] : memref<6xf32, #tpu.memory_space<smem>>
      %19 = vector.broadcast %18 : f32 to vector<8x128xf32>
      %20 = arith.mulf %16, %19 : vector<8x128xf32>
      %21 = arith.index_cast %arg0 : i32 to index
      %22 = memref.load %arg5[%21] : memref<6xf32, #tpu.memory_space<smem>>
      %23 = vector.broadcast %22 : f32 to vector<8x128xf32>
      %24 = arith.addf %20, %23 : vector<8x128xf32>
      %c0_18 = arith.constant 0 : index
      %c0_19 = arith.constant 0 : index
      %c0_20 = arith.constant 0 : index
      %25 = vector.load %arg9[%c0_18, %c0_19, %c0_20] : memref<1x8x128xf32, #tpu.memory_space<vmem>>, vector<1x8x128xf32>
      %26 = vector.shape_cast %25 : vector<1x8x128xf32> to vector<8x128xf32>
      %27 = vector.shape_cast %24 : vector<8x128xf32> to vector<1x8x128xf32>
      tpu.vector_store %arg9[%c0_18, %c0_19, %c0_20], %27 {strides = array<i32>} : memref<1x8x128xf32, #tpu.memory_space<vmem>>, vector<1x8x128xf32>,
    } else {
    }
    return
  }
  func.func @transform_0(%arg0: i32, %arg1: i32, %arg2: i32, %arg3: memref<1xi32, #tpu.memory_space<smem>>, %arg4: memref<6xf32, #tpu.memory_space<smem>>, %arg5: memref<6xf32, #tpu.memory_space<smem>>) -> (i32, i32, i32, i32) {
    %c0_i32 = arith.constant 0 : i32
    %c0_i32_0 = arith.constant 0 : i32
    %c0_i32_1 = arith.constant 0 : i32
    return %arg1, %arg2, %c0_i32, %c0_i32_0 : i32, i32, i32, i32
  }
  func.func @transform_1(%arg0: i32, %arg1: i32, %arg2: i32, %arg3: memref<1xi32, #tpu.memory_space<smem>>, %arg4: memref<6xf32, #tpu.memory_space<smem>>, %arg5: memref<6xf32, #tpu.memory_space<smem>>) -> (i32, i32) {
    %c0_i32 = arith.constant 0 : i32
    %c0_i32_0 = arith.constant 0 : i32
    %c0_i32_1 = arith.constant 0 : i32
    return %c0_i32, %c0_i32_0 : i32, i32
  }
  func.func @transform_2(%arg0: i32, %arg1: i32, %arg2: i32, %arg3: memref<1xi32, #tpu.memory_space<smem>>, %arg4: memref<6xf32, #tpu.memory_space<smem>>, %arg5: memref<6xf32, #tpu.memory_space<smem>>) -> (i32, i32, i32) {
    %c1_i32 = arith.constant 1 : i32
    %0 = arith.muli %arg1, %c1_i32 : i32
    %1 = arith.addi %0, %arg2 : i32
    %2 = arith.index_cast %1 : i32 to index
    %3 = memref.load %arg3[%2] : memref<1xi32, #tpu.memory_space<smem>>
    %c0_i32 = arith.constant 0 : i32
    %c0_i32_0 = arith.constant 0 : i32
    return %arg0, %3, %c0_i32 : i32, i32, i32
  }
  func.func @transform_3(%arg0: i32, %arg1: i32, %arg2: i32, %arg3: memref<1xi32, #tpu.memory_space<smem>>, %arg4: memref<6xf32, #tpu.memory_space<smem>>, %arg5: memref<6xf32, #tpu.memory_space<smem>>) -> (i32, i32, i32) {
    %c0_i32 = arith.constant 0 : i32
    %c0_i32_0 = arith.constant 0 : i32
    return %arg0, %arg1, %c0_i32 : i32, i32, i32
  }
}

</mosaic_0001>

<llo_original>
// kernel: tpu_custom_call.1
$region0: #{tpu_custom_call.1}
  #allocation0 [shape = 'u32[]', space=smem, size = 0x4, offset = 0x4, fixed_abs, tag = 'smem constant byte address 0x4 - core index']
  #allocation1 [shape = 'u32[144,128]{1,0:T(1,128)}', space=vmem, size = 0x12000, scoped, tag = 'internal scratch']
  #allocation2 [shape = 'f32[8,16]{1,0:T(8,128)}', space=vmem, size = 0x1000, scoped, tag = 'scratch operand']
  #allocation3 [shape = 's32[1]{0}', space=sflag, size = 0x4, scoped, tag = 'scoped memory for tpu_custom_call.1']
  #allocation4 [shape = 's32[1]{0:T(128)S(6)}', space=smem, size = 0x200, scoped, tag = 'prefetched SMEM operand 0']
  #allocation5 [shape = 'u8[512]{0}', space=smem, size = 0x200, scoped, tag = 'prefetched SMEM operand 1']
  #allocation6 [shape = 'u8[512]{0}', space=smem, size = 0x200, scoped, tag = 'prefetched SMEM operand 2']
  %s0 = inlined_call_operand.<no memory space> [shape: s32[1], index: 0, kind: input, shape index: {}]
  %s1 = inlined_call_operand.vmem [shape: f32[6], index: 1, kind: input, shape index: {}]
  %s2 = inlined_call_operand.vmem [shape: f32[6], index: 2, kind: input, shape index: {}]
  %s3 = inlined_call_operand.vmem [shape: f32[1,1,8,16], index: 3, kind: input, shape index: {}]
  %s4 = inlined_call_operand.hbm [shape: f32[16,128], index: 4, kind: input, shape index: {}]
  %s5 = inlined_call_operand.hbm [shape: f32[6,16,16], index: 5, kind: input, shape index: {}]
  %s6 = inlined_call_operand.hbm [shape: f32[6,8,128], index: 6, kind: output, shape index: {}]
  %s7 = sld [smem:[#allocation0]]
  $region61: #{tpu_custom_call.1} parent=0
    _
  %s9 = ssub.s32 1, %s7
  %s10 = scalar_select 0, %s9, %s7
  %11 = sst [smem:[#allocation4]] %s0
  %s12 = sshll.u32 %s1, 4
  %s13 = int_to_ptr.vmem [resolvable:$true] %s12
  %15 = dma.vmem_to_smem %s13, 16, [#allocation5], [#allocation3]
  %s16 = sshll.u32 %s2, 4
  %s17 = int_to_ptr.vmem [resolvable:$true] %s16
  %19 = dma.vmem_to_smem %s17, 16, [#allocation6], [#allocation3]
  %20 = dma.done [#allocation3], 32
  %21 = sfence
  $region1: #{tpu_custom_call.1} parent=0
    #allocation7 [shape = 'u8[8192]{0}', space=vmem, size = 0x2000, scoped, tag = 'input window, operand 4, single buffered']
    #allocation8 [shape = 's32[2]{0}', space=sflag, size = 0x8, scoped, tag = 'scoped memory for tpu_custom_call.1']
    #allocation9 [shape = 's32[2]{0}', space=sflag, size = 0x8, scoped, tag = 'scoped memory for tpu_custom_call.1']
    #allocation10 [shape = 'u8[16384]{0}', space=vmem, size = 0x4000, scoped, tag = 'input window, operand 5']
    #allocation11 [shape = 's32[2]{0}', space=sflag, size = 0x8, scoped, tag = 'scoped memory for tpu_custom_call.1']
    #allocation12 [shape = 'u8[8192]{0}', space=vmem, size = 0x2000, scoped, tag = 'output window, operand 0']
    %22 = vsyncpa [#allocation8], 0
    %23 = vsyncpa [#allocation11], 0
    %s24 = scalar_lea.sflag [#allocation11], 1
    %25 = vsyncpa %s24, 0
    %26 = vsyncpa [#allocation9], 0
    %s27 = scalar_lea.sflag [#allocation9], 1
    %28 = vsyncpa %s27, 0
    loop: start=0, step=1, limit=8
    $region2: #{tpu_custom_call.1} parent=1 // loop_pre_header
      _
    $region3: #{tpu_custom_call.1} parent=1 // loop_header
      %s30 = sphi 0, %s34
      %p31 = scmp.ge.s32.totalorder %s30, 8
      %s37 = sphi 0, %s56
      %s38 = sphi 0, %s52
      %s39 = sphi 0, %s48
      %s40 = sphi 0, %s37
      %s41 = sphi 0, %s38
      %s42 = sphi 0, %s39
      %s43 = sphi 0, %s40
      %s44 = sphi 0, %s41
      %s45 = sphi 0, %s42
      %s61 = sphi 0, %s63
      %s64 = sphi 0, %s61
      %s65 = sphi 0, %s64
      %s81 = sphi 0, %s65
      %s85 = sphi 0, %s85
      %s87 = sphi 0, %s85
      %s88 = sphi 0, %s87
      %s102 = sphi 0, %s88
      %s114 = sphi 0, %s116
      %s117 = sphi 0, %s114
      %s118 = sphi 0, %s117
      %s134 = sphi 0, %s118
      %s142 = sphi 0, %s144
      %s145 = sphi 0, %s142
      %s146 = sphi 0, %s145
      %s162 = sphi 0, %s146
    $region4: #{tpu_custom_call.1} parent=1 // loop_header_branch
      %33 = sbr.rel (%p31) target = $region8
    $region5: #{tpu_custom_call.1} parent=1 // loop_body
      %s35 = ssub.s32 %s30, 1
      %s36 = ssub.s32 %s30, 2
      %s46 = sadd.s32 1, %s39
      %p47 = scmp.ge.s32.totalorder %s46, 1
      %s48 = scalar_select %p47, 0, %s46
      %s49 = sadd.s32 1, %s38
      %s50 = scalar_select %p47, %s49, %s38
      %p51 = scmp.ge.s32.totalorder %s50, 1
      %s52 = scalar_select %p51, 0, %s50
      %s53 = sadd.s32 1, %s37
      %s54 = scalar_select %p51, %s53, %s37
      %p55 = scmp.ge.s32.totalorder %s54, 6
      %s56 = scalar_select %p55, 0, %s54
      %s57 = ssub.s32 %s38, %s52
      %s58 = ssub.s32 %s39, %s48
      %s59 = sor.u32 %s57, %s58
      %p60 = scmp.eq.s32.totalorder %s59, 0
      %s62 = sadd.s32 %s61, 1
      %s63 = scalar_select %p60, %s61, %s62
      %p66 = pneg %p60
      %p67 = scmp.eq.s32.totalorder %s30, 5
      %p68 = por %p66, %p67
      %p69 = scmp.ne.s32.totalorder %s61, %s64
      %p70 = scmp.eq.s32.totalorder %s30, 0
      %p71 = por %p69, %p70
      %p72 = scmp.ne.s32.totalorder %s61, %s64
      %p73 = scmp.eq.s32.totalorder %s35, 5
      %p74 = por %p72, %p73
      %p75 = scmp.ne.s32.totalorder %s64, %s65
      %p76 = scmp.eq.s32.totalorder %s35, 0
      %p77 = por %p75, %p76
      %p78 = scmp.ne.s32.totalorder %s64, %s65
      %p79 = scmp.eq.s32.totalorder %s36, 5
      %p80 = por %p78, %p79
      %p82 = scmp.ne.s32.totalorder %s65, %s81
      %p83 = scmp.eq.s32.totalorder %s36, 0
      %p84 = por %p82, %p83
      %s86 = sadd.s32 %s85, 1
      %p89 = scmp.eq.s32.totalorder %s30, 5
      %p90 = scmp.ne.s32.totalorder %s85, %s87
      %p91 = scmp.eq.s32.totalorder %s30, 0
      %p92 = por %p90, %p91
      %p93 = scmp.ne.s32.totalorder %s85, %s87
      %p94 = scmp.eq.s32.totalorder %s35, 5
      %p95 = por %p93, %p94
      %p96 = scmp.ne.s32.totalorder %s87, %s88
      %p97 = scmp.eq.s32.totalorder %s35, 0
      %p98 = por %p96, %p97
      %p99 = scmp.ne.s32.totalorder %s87, %s88
      %p100 = scmp.eq.s32.totalorder %s36, 5
      %p101 = por %p99, %p100
      %p103 = scmp.ne.s32.totalorder %s88, %s102
      %p104 = scmp.eq.s32.totalorder %s36, 0
      %p105 = por %p103, %p104
      %s106 = sadd.s32 %s38, %s39
      %s107 = sld [smem:[#allocation4 + %s106]]
      %s108 = sadd.s32 %s52, %s48
      %s109 = sld [smem:[#allocation4 + %s108]]
      %s110 = ssub.s32 %s37, %s56
      %s111 = ssub.s32 %s107, %s109
      %s112 = sor.u32 %s110, %s111
      %p113 = scmp.eq.s32.totalorder %s112, 0
      %s115 = sadd.s32 %s114, 1
      %s116 = scalar_select %p113, %s114, %s115
      %p119 = pneg %p113
      %p120 = scmp.eq.s32.totalorder %s30, 5
      %p121 = por %p119, %p120
      %p122 = scmp.ne.s32.totalorder %s114, %s117
      %p123 = scmp.eq.s32.totalorder %s30, 0
      %p124 = por %p122, %p123
      %p125 = scmp.ne.s32.totalorder %s114, %s117
      %p126 = scmp.eq.s32.totalorder %s35, 5
      %p127 = por %p125, %p126
      %p128 = scmp.ne.s32.totalorder %s117, %s118
      %p129 = scmp.eq.s32.totalorder %s35, 0
      %p130 = por %p128, %p129
      %p131 = scmp.ne.s32.totalorder %s117, %s118
      %p132 = scmp.eq.s32.totalorder %s36, 5
      %p133 = por %p131, %p132
      %p135 = scmp.ne.s32.totalorder %s118, %s134
      %p136 = scmp.eq.s32.totalorder %s36, 0
      %p137 = por %p135, %p136
      %s138 = ssub.s32 %s37, %s56
      %s139 = ssub.s32 %s38, %s52
      %s140 = sor.u32 %s138, %s139
      %p141 = scmp.eq.s32.totalorder %s140, 0
      %s143 = sadd.s32 %s142, 1
      %s144 = scalar_select %p141, %s142, %s143
      %p147 = pneg %p141
      %p148 = scmp.eq.s32.totalorder %s30, 5
      %p149 = por %p147, %p148
      %p150 = scmp.ne.s32.totalorder %s142, %s145
      %p151 = scmp.eq.s32.totalorder %s30, 0
      %p152 = por %p150, %p151
      %p153 = scmp.ne.s32.totalorder %s142, %s145
      %p154 = scmp.eq.s32.totalorder %s35, 5
      %p155 = por %p153, %p154
      %p156 = scmp.ne.s32.totalorder %s145, %s146
      %p157 = scmp.eq.s32.totalorder %s35, 0
      %p158 = por %p156, %p157
      %p159 = scmp.ne.s32.totalorder %s145, %s146
      %p160 = scmp.eq.s32.totalorder %s36, 5
      %p161 = por %p159, %p160
      %p163 = scmp.ne.s32.totalorder %s146, %s162
      %p164 = scmp.eq.s32.totalorder %s36, 0
      %p165 = por %p163, %p164
      %p166 = scmp.le.s32.totalorder 1, %s30
      %p167 = scmp.lt.s32.totalorder %s30, 7
      %p168 = pnand %p166, %p167
      %p169 = pneg %p168
      // Predicated region
      $region9: #{tpu_custom_call.1} parent=5 // pred_check
        _
      $region10: #{tpu_custom_call.1} parent=5 // pred_check_branch
        %171 = sbr.rel (%p168) target = $region12
      $region11: #{tpu_custom_call.1} parent=5 // pred_region
        %s172 = ssub.s32 %s30, 1
        // Predicated region
        $region13: #{tpu_custom_call.1} parent=11 // pred_check
          %p173 = pneg %p77
        $region14: #{tpu_custom_call.1} parent=11 // pred_check_branch
          %175 = sbr.rel (%p173) target = $region16
        $region15: #{tpu_custom_call.1} parent=11 // pred_region
          %p176 = scmp.lt.s32.totalorder %s41, 0
          %s177 = scalar_select %p176, %s41, 0
          %p178 = scmp.lt.s32.totalorder %s42, 0
          %s179 = scalar_select %p178, %s42, 0
          %s180 = sadd.s32 %s179, %s177
          %s181 = smul.addr %s180, 8
          %s182 = scalar_lea.vmem %s3, %s181
        $region16: #{tpu_custom_call.1} parent=11 // pred_fallthru
          _
        // Predicated region
        $region17: #{tpu_custom_call.1} parent=11 // pred_check
          %p183 = pneg %p98
        $region18: #{tpu_custom_call.1} parent=11 // pred_check_branch
          %185 = sbr.rel (%p183) target = $region20
        $region19: #{tpu_custom_call.1} parent=11 // pred_region
          %s187 = ssub.s32 256, 256
          %188 = vsyncadd [#allocation8], %s187
          %s189 = sshll.u32 [#allocation7], 4
          %s190 = int_to_ptr.vmem [resolvable:$true] %s189
          %195 = dma.hbm_to_vmem [thread:$0]  %s4, 256, %s190, [#allocation8], 128, 128, 8
        $region20: #{tpu_custom_call.1} parent=11 // pred_fallthru
          _
      $region12: #{tpu_custom_call.1} parent=5 // pred_fallthru
        _
      %p196 = scmp.lt.s32.totalorder %s30, 6
      // Predicated region
      $region21: #{tpu_custom_call.1} parent=5 // pred_check
        %p197 = pneg %p196
      $region22: #{tpu_custom_call.1} parent=5 // pred_check_branch
        %199 = sbr.rel (%p197) target = $region24
      $region23: #{tpu_custom_call.1} parent=5 // pred_region
        // Predicated region
        $region25: #{tpu_custom_call.1} parent=23 // pred_check
          %p200 = pneg %p124
        $region26: #{tpu_custom_call.1} parent=23 // pred_check_branch
          %202 = sbr.rel (%p200) target = $region28
        $region27: #{tpu_custom_call.1} parent=23 // pred_region
          %s203 = sand.u32 %s114, 1
          %s204 = scalar_lea.sflag [#allocation11], %s203
          %s205 = sand.u32 %s114, 1
          %s206 = smul.addr %s205, 16
          %s207 = scalar_lea.vmem [#allocation10], %s206
          %s208 = sadd.s32 %s38, %s39
          %s209 = sld [smem:[#allocation4 + %s208]]
          %s210 = smul.u32 2, %s209
          %s212 = ssub.s32 256, 256
          %213 = vsyncadd %s204, %s212
          %s214 = smul.addr %s37, 2
          %s215 = sadd.s32 %s210, %s214
          %s216 = smul.addr %s215, 128
          %s217 = scalar_lea.hbm %s5, %s216
          %s218 = sshll.u32 %s207, 4
          %s219 = int_to_ptr.vmem [resolvable:$true] %s218
          %224 = dma.hbm_to_vmem [thread:$0]  %s217, 256, %s219, %s204, 128, 128, 8
        $region28: #{tpu_custom_call.1} parent=23 // pred_fallthru
          _
      $region24: #{tpu_custom_call.1} parent=5 // pred_fallthru
        _
      %p225 = scmp.le.s32.totalorder 1, %s30
      %p226 = scmp.lt.s32.totalorder %s30, 7
      %p227 = pnand %p225, %p226
      %p228 = pneg %p227
      // Predicated region
      $region29: #{tpu_custom_call.1} parent=5 // pred_check
        _
      $region30: #{tpu_custom_call.1} parent=5 // pred_check_branch
        %230 = sbr.rel (%p227) target = $region32
      $region31: #{tpu_custom_call.1} parent=5 // pred_region
        %s231 = ssub.s32 %s30, 1
        // Predicated region
        $region33: #{tpu_custom_call.1} parent=31 // pred_check
          %p232 = pneg %p98
        $region34: #{tpu_custom_call.1} parent=31 // pred_check_branch
          %234 = sbr.rel (%p232) target = $region36
        $region35: #{tpu_custom_call.1} parent=31 // pred_region
          %235 = dma.done [#allocation8], 256
        $region36: #{tpu_custom_call.1} parent=31 // pred_fallthru
          _
        %s236 = sand.u32 %s117, 1
        %s237 = scalar_lea.sflag [#allocation11], %s236
        %s238 = sand.u32 %s117, 1
        %s239 = smul.addr %s238, 16
        %s240 = scalar_lea.vmem [#allocation10], %s239
        // Predicated region
        $region37: #{tpu_custom_call.1} parent=31 // pred_check
          %p241 = pneg %p130
        $region38: #{tpu_custom_call.1} parent=31 // pred_check_branch
          %243 = sbr.rel (%p241) target = $region40
        $region39: #{tpu_custom_call.1} parent=31 // pred_region
          %244 = dma.done %s237, 256
        $region40: #{tpu_custom_call.1} parent=31 // pred_fallthru
          _
        %p245 = scmp.lt.s32.totalorder %s41, 0
        %s246 = scalar_select %p245, %s41, 0
        %p247 = scmp.lt.s32.totalorder %s42, 0
        %s248 = scalar_select %p247, %s42, 0
        %s249 = sadd.s32 %s248, %s246
        %s250 = smul.addr %s249, 8
        %s251 = scalar_lea.vmem %s3, %s250
        %p252 = pneg %p77
        %p253 = pneg %p74
        %p254 = pneg %p98
        %p255 = pneg %p95
        %s256 = sand.u32 %s117, 1
        %s257 = scalar_lea.sflag [#allocation11], %s256
        %s258 = sand.u32 %s117, 1
        %s259 = smul.addr %s258, 16
        %s260 = scalar_lea.vmem [#allocation10], %s259
        %p261 = pneg %p130
        %p262 = pneg %p127
        %p263 = pneg %p158
        %p264 = pneg %p155
        %s265 = sand.u32 %s145, 1
        %s266 = scalar_lea.sflag [#allocation9], %s265
        %s267 = sand.u32 %s145, 1
        %s268 = smul.addr %s267, 8
        %s269 = scalar_lea.vmem [#allocation12], %s268
        %p270 = scmp.lt.s32.totalorder %s41, 0
        %s271 = scalar_select %p270, %s41, 0
        %p272 = scmp.lt.s32.totalorder %s42, 0
        %s273 = scalar_select %p272, %s42, 0
        %s274 = sadd.s32 %s273, %s271
        %s275 = smul.addr %s274, 8
        %s276 = scalar_lea.vmem %s3, %s275
        %s277 = sadd.s32 %s41, %s42
        %s278 = sld [smem:[#allocation4 + %s277]]
        %s279 = smul.u32 2, %s278
        %p280 = scmp.eq.s32.totalorder %s42, 0
        // Predicated region
        $region41: #{tpu_custom_call.1} parent=31 // pred_check
          %p281 = pneg %p280
        $region42: #{tpu_custom_call.1} parent=31 // pred_check_branch
          %283 = sbr.rel (%p281) target = $region44
        $region43: #{tpu_custom_call.1} parent=31 // pred_region
          %vm284 = vcmask 130048
          %285 = vst.msk [vmem:[#allocation2] sm:$0xff] %vm284, 0.0
        $region44: #{tpu_custom_call.1} parent=31 // pred_fallthru
          _
        %v286 = vld [vmem:[%s276] sm:$0xff]
        %v287 = vld [vmem:[%s240] sm:$0xff]
        %v288 = vld [vmem:[%s240 + $0x8] sm:$0xff]
        %v289 = vld [vmem:[#allocation2] sm:$0xff]
        %vm290 = vcmask 130048
        %v292 = vsel %vm290, %v286, 0
        %294 = vmatprep.subr.mxu0 0.0
        %295 = vmatpush1.msra.mxu0 %v287
        %296 = vmatprep.subr.mxu0 0.0
        %297 = vmatpush1.msra.mxu0 %v288
        %298 = vmatprep.subr.mxu0 0.0
        %299 = vmatpush1.msra.mxu0 0.0
        %300 = vmatprep.subr.mxu0 0.0
        %301 = vmatpush1.msra.mxu0 0.0
        %302 = vmatprep.subr.mxu0 0.0
        %303 = vmatpush1.msra.mxu0 0.0
        %304 = vmatprep.subr.mxu0 0.0
        %305 = vmatpush1.msra.mxu0 0.0
        %306 = vmatprep.subr.mxu0 0.0
        %307 = vmatpush1.msra.mxu0 0.0
        %308 = vmatprep.subr.mxu0 0.0
        %309 = vmatpush1.msra.mxu0 0.0
        %310 = vmatprep.subr.mxu0 0.0
        %311 = vmatpush1.msra.mxu0 0.0
        %312 = vmatprep.subr.mxu0 0.0
        %313 = vmatpush1.msra.mxu0 0.0
        %314 = vmatprep.subr.mxu0 0.0
        %315 = vmatpush1.msra.mxu0 0.0
        %316 = vmatprep.subr.mxu0 0.0
        %317 = vmatpush1.msra.mxu0 0.0
        %318 = vmatprep.subr.mxu0 0.0
        %319 = vmatpush1.msra.mxu0 0.0
        %320 = vmatprep.subr.mxu0 0.0
        %321 = vmatpush1.msra.mxu0 0.0
        %322 = vmatprep.subr.mxu0 0.0
        %323 = vmatpush1.msra.mxu0 0.0
        %324 = vmatprep.subr.mxu0 0.0
        %325 = vmatpush1.msra.mxu0 0.0
        %326 = vmatprep.subr.mxu0 0.0
        %327 = vmatpush1.msra.mxu0 0.0
        %328 = vmatprep.subr.mxu0 0.0
        %329 = vmatpush1.msra.mxu0 0.0
        %330 = vmatprep.subr.mxu0 0.0
        %331 = vmatpush1.msra.mxu0 0.0
        %332 = vmatprep.subr.mxu0 0.0
        %333 = vmatpush1.msra.mxu0 0.0
        %334 = vmatprep.subr.mxu0 0.0
        %335 = vmatpush1.msra.mxu0 0.0
        %336 = vmatprep.subr.mxu0 0.0
        %337 = vmatpush1.msra.mxu0 0.0
        %338 = vmatprep.subr.mxu0 0.0
        %339 = vmatpush1.msra.mxu0 0.0
        %340 = vmatprep.subr.mxu0 0.0
        %341 = vmatpush1.msra.mxu0 0.0
        %342 = vmatprep.subr.mxu0 0.0
        %343 = vmatpush1.msra.mxu0 0.0
        %344 = vmatprep.subr.mxu0 0.0
        %345 = vmatpush1.msra.mxu0 0.0
        %346 = vmatprep.subr.mxu0 0.0
        %347 = vmatpush1.msra.mxu0 0.0
        %348 = vmatprep.subr.mxu0 0.0
        %349 = vmatpush1.msra.mxu0 0.0
        %350 = vmatprep.subr.mxu0 0.0
        %351 = vmatpush1.msra.mxu0 0.0
        %352 = vmatprep.subr.mxu0 0.0
        %353 = vmatpush1.msra.mxu0 0.0
        %354 = vmatprep.subr.mxu0 0.0
        %355 = vmatpush1.msra.mxu0 0.0
        %356 = vmatprep.subr.mxu0 0.0
        %357 = vmatpush1.msra.mxu0 0.0
        %358 = vmatprep.mubr.f32.mxu0 0.0
        %359 = vmatmul.mubr.f32.gmra.mrb[0].mxu0 %v292
        %v360 = vpop.f32.mrb[0].mxu0
        %v361 = vadd.f32 0.0, %v360
        %v362 = vpop.f32.mrb[0].mxu0
        %363 = vdwg.mxu0
        %v364 = vadd.f32 %v289, %v361
        %365 = vst.msk [vmem:[#allocation2] sm:$0xff] %vm290, %v364
        // Predicated region
        $region45: #{tpu_custom_call.1} parent=31 // pred_check
          %p366 = pneg %p280
        $region46: #{tpu_custom_call.1} parent=31 // pred_check_branch
          %368 = sbr.rel (%p366) target = $region48
        $region47: #{tpu_custom_call.1} parent=31 // pred_region
          %v369 = vld [vmem:[#allocation2] sm:$0xff]
          %v370 = vld [vmem:[#allocation7] sm:$0xff]
          %v371 = vld [vmem:[#allocation7 + $0x8] sm:$0xff]
          %v373 = vsel %vm290, %v369, 0
          %375 = vmatprep.subr.mxu0 0.0
          %376 = vmatpush1.msra.mxu0 %v370
          %377 = vmatprep.subr.mxu0 0.0
          %378 = vmatpush1.msra.mxu0 %v371
          %379 = vmatprep.subr.mxu0 0.0
          %380 = vmatpush1.msra.mxu0 0.0
          %381 = vmatprep.subr.mxu0 0.0
          %382 = vmatpush1.msra.mxu0 0.0
          %383 = vmatprep.subr.mxu0 0.0
          %384 = vmatpush1.msra.mxu0 0.0
          %385 = vmatprep.subr.mxu0 0.0
          %386 = vmatpush1.msra.mxu0 0.0
          %387 = vmatprep.subr.mxu0 0.0
          %388 = vmatpush1.msra.mxu0 0.0
          %389 = vmatprep.subr.mxu0 0.0
          %390 = vmatpush1.msra.mxu0 0.0
          %391 = vmatprep.subr.mxu0 0.0
          %392 = vmatpush1.msra.mxu0 0.0
          %393 = vmatprep.subr.mxu0 0.0
          %394 = vmatpush1.msra.mxu0 0.0
          %395 = vmatprep.subr.mxu0 0.0
          %396 = vmatpush1.msra.mxu0 0.0
          %397 = vmatprep.subr.mxu0 0.0
          %398 = vmatpush1.msra.mxu0 0.0
          %399 = vmatprep.subr.mxu0 0.0
          %400 = vmatpush1.msra.mxu0 0.0
          %401 = vmatprep.subr.mxu0 0.0
          %402 = vmatpush1.msra.mxu0 0.0
          %403 = vmatprep.subr.mxu0 0.0
          %404 = vmatpush1.msra.mxu0 0.0
          %405 = vmatprep.subr.mxu0 0.0
          %406 = vmatpush1.msra.mxu0 0.0
          %407 = vmatprep.subr.mxu0 0.0
          %408 = vmatpush1.msra.mxu0 0.0
          %409 = vmatprep.subr.mxu0 0.0
          %410 = vmatpush1.msra.mxu0 0.0
          %411 = vmatprep.subr.mxu0 0.0
          %412 = vmatpush1.msra.mxu0 0.0
          %413 = vmatprep.subr.mxu0 0.0
          %414 = vmatpush1.msra.mxu0 0.0
          %415 = vmatprep.subr.mxu0 0.0
          %416 = vmatpush1.msra.mxu0 0.0
          %417 = vmatprep.subr.mxu0 0.0
          %418 = vmatpush1.msra.mxu0 0.0
          %419 = vmatprep.subr.mxu0 0.0
          %420 = vmatpush1.msra.mxu0 0.0
          %421 = vmatprep.subr.mxu0 0.0
          %422 = vmatpush1.msra.mxu0 0.0
          %423 = vmatprep.subr.mxu0 0.0
          %424 = vmatpush1.msra.mxu0 0.0
          %425 = vmatprep.subr.mxu0 0.0
          %426 = vmatpush1.msra.mxu0 0.0
          %427 = vmatprep.subr.mxu0 0.0
          %428 = vmatpush1.msra.mxu0 0.0
          %429 = vmatprep.subr.mxu0 0.0
          %430 = vmatpush1.msra.mxu0 0.0
          %431 = vmatprep.subr.mxu0 0.0
          %432 = vmatpush1.msra.mxu0 0.0
          %433 = vmatprep.subr.mxu0 0.0
          %434 = vmatpush1.msra.mxu0 0.0
          %435 = vmatprep.subr.mxu0 0.0
          %436 = vmatpush1.msra.mxu0 0.0
          %437 = vmatprep.subr.mxu0 0.0
          %438 = vmatpush1.msra.mxu0 0.0
          %439 = vmatprep.mubr.f32.mxu0 0.0
          %440 = vmatmul.mubr.f32.gmra.mrb[0].mxu0 %v373
          %v441 = vpop.f32.mrb[0].mxu0
          %v442 = vadd.f32 0.0, %v441
          %v443 = vpop.f32.mrb[0].mxu0
          %444 = vdwg.mxu0
          %s445 = sld [smem:[#allocation5 + %s40]]
          %v446 = vstv %s445
          %v447 = vmul.f32 %v442, %v446
          %s448 = sld [smem:[#allocation6 + %s40]]
          %v449 = vstv %s448
          %v450 = vadd.f32 %v447, %v449
          %451 = vst [vmem:[%s269] sm:$0xff] %v450
        $region48: #{tpu_custom_call.1} parent=31 // pred_fallthru
          _
        %s452 = sand.u32 %s145, 1
        %s453 = scalar_lea.sflag [#allocation9], %s452
        %s454 = sand.u32 %s145, 1
        %s455 = smul.addr %s454, 8
        %s456 = scalar_lea.vmem [#allocation12], %s455
        // Predicated region
        $region49: #{tpu_custom_call.1} parent=31 // pred_check
          %p457 = pneg %p155
        $region50: #{tpu_custom_call.1} parent=31 // pred_check_branch
          %459 = sbr.rel (%p457) target = $region52
        $region51: #{tpu_custom_call.1} parent=31 // pred_region
          %s461 = ssub.s32 128, 128
          %462 = vsyncadd %s453, %s461
          %s463 = sadd.s32 %s41, %s40
          %s464 = smul.addr %s463, 128
          %s465 = scalar_lea.hbm %s6, %s464
          %s467 = sshll.u32 %s456, 4
          %s468 = int_to_ptr.vmem [resolvable:$true] %s467
          %470 = dma.vmem_to_hbm [thread:$0]  %s468, 128, %s465, %s453
        $region52: #{tpu_custom_call.1} parent=31 // pred_fallthru
          _
      $region32: #{tpu_custom_call.1} parent=5 // pred_fallthru
        _
      %p471 = scmp.le.s32.totalorder 2, %s30
      // Predicated region
      $region53: #{tpu_custom_call.1} parent=5 // pred_check
        %p472 = pneg %p471
      $region54: #{tpu_custom_call.1} parent=5 // pred_check_branch
        %474 = sbr.rel (%p472) target = $region56
      $region55: #{tpu_custom_call.1} parent=5 // pred_region
        %s475 = ssub.s32 %s30, 2
        // Predicated region
        $region57: #{tpu_custom_call.1} parent=55 // pred_check
          %p476 = pneg %p161
        $region58: #{tpu_custom_call.1} parent=55 // pred_check_branch
          %478 = sbr.rel (%p476) target = $region60
        $region59: #{tpu_custom_call.1} parent=55 // pred_region
          %s479 = sand.u32 %s146, 1
          %s480 = scalar_lea.sflag [#allocation9], %s479
          %s481 = sand.u32 %s146, 1
          %s482 = smul.addr %s481, 8
          %s483 = scalar_lea.vmem [#allocation12], %s482
          %484 = dma.done %s480, 128
        $region60: #{tpu_custom_call.1} parent=55 // pred_fallthru
          _
      $region56: #{tpu_custom_call.1} parent=5 // pred_fallthru
        _
    $region6: #{tpu_custom_call.1} parent=1 // loop_footer
      %s34 = sadd.s32 1, %s30
    $region7: #{tpu_custom_call.1} parent=1 // loop_footer_branch
      %29 = sbr.rel target = $region3
    $region8: #{tpu_custom_call.1} parent=1 // loop_exit
      _
    %485 = vsyncpa [#allocation8], 1
    %s486 = scalar_lea.sflag [#allocation8], 1
    %487 = vsyncpa %s486, 1
    %488 = vsyncpa [#allocation11], 1
    %s489 = scalar_lea.sflag [#allocation11], 1
    %490 = vsyncpa %s489, 1
    %491 = vsyncpa [#allocation9], 1
    %s492 = scalar_lea.sflag [#allocation9], 1
    %493 = vsyncpa %s492, 1

</llo_original>
